<compile_context>
chip_gen: v7x
topology: tpu7x:2x2x1
jax: 0.10.0
libtpu: 0.0.40
codegen_flags: <defaults>
</compile_context>

<pallas_src>
import functools

import jax
import jax.numpy as jnp
from jax.experimental import pallas as pl
from jax.experimental.pallas import tpu as pltpu


# ----------------------------------------------------------------------------
# In-kernel math
# ----------------------------------------------------------------------------
def _per_token_params(x, maxq, clip_ratio, sym):
    """Per-row quant params from a (TM, D) f32 tile -> (scale, zero), each (TM, 1)."""
    zeros = jnp.zeros((x.shape[0], 1), jnp.float32)
    xmin = jnp.minimum(jnp.min(x, axis=1, keepdims=True), zeros) * clip_ratio
    xmax = jnp.maximum(jnp.max(x, axis=1, keepdims=True), zeros) * clip_ratio
    if sym:
        xmax = jnp.maximum(jnp.abs(xmin), xmax)
        scale = jnp.where(xmax == 0.0, 1.0, xmax / maxq)
        zero = jnp.zeros_like(scale)
    else:
        deg = (xmin == 0.0) & (xmax == 0.0)
        xmin = jnp.where(deg, -1.0, xmin)
        xmax = jnp.where(deg, 1.0, xmax)
        scale = (xmax - xmin) / maxq
        zero = jnp.round(-xmin / scale)
    return scale, zero


def _qdq_math(x, scale, zero, maxq, sym, exact_div):
    """Quant-dequant with per-row (TM, 1) params broadcast over lanes.

    exact_div=True  : per-element x / scale (bit-identical bin boundaries vs. the
                      reference; used for f32 streams where the divide hides behind HBM).
    exact_div=False : exact divide once per ROW on the (TM, 1) scale vector, then a
                      broadcast multiply — O(TM) divides keep bf16 streams DMA-bound
                      on v7x instead of saturating the VPU/EUP.
    """
    if exact_div:
        xs = x / scale
    else:
        xs = x * (1.0 / scale)
    if sym:
        q = jnp.clip(jnp.round(xs), -(maxq + 1.0), maxq)
        return scale * q
    q = jnp.clip(jnp.round(xs) + zero, 0.0, maxq)
    return scale * (q - zero)


# ----------------------------------------------------------------------------
# Kernels
# ----------------------------------------------------------------------------
def _find_params_kernel(x_ref, params_ref, *, maxq, clip_ratio, sym):
    """Per-token params only. x: (TM, D) -> packed params (TM, 2) f32 ([:,0]=scale, [:,1]=zero)."""
    x = x_ref[...].astype(jnp.float32)
    scale, zero = _per_token_params(x, maxq, clip_ratio, sym)
    params_ref[:, 0:1] = scale
    params_ref[:, 1:2] = zero


def _fused_find_qdq_kernel(x_ref, o_ref, params_ref, *, maxq, clip_ratio, sym, exact_div):
    """Fused: per-token params + quant-dequant in one pass (read x once, write y once)."""
    x = x_ref[...].astype(jnp.float32)
    scale, zero = _per_token_params(x, maxq, clip_ratio, sym)
    o_ref[...] = _qdq_math(x, scale, zero, maxq, sym, exact_div).astype(o_ref.dtype)
    params_ref[:, 0:1] = scale
    params_ref[:, 1:2] = zero


def _qdq_kernel(x_ref, params_ref, o_ref, *, maxq, sym, exact_div):
    """Quant-dequant with precomputed packed per-token params ((TM, 2) blocks)."""
    x = x_ref[...].astype(jnp.float32)
    p = params_ref[...]
    scale = p[:, 0:1]
    zero = p[:, 1:2]
    o_ref[...] = _qdq_math(x, scale, zero, maxq, sym, exact_div).astype(o_ref.dtype)


# ----------------------------------------------------------------------------
# Tile sizing helpers
# ----------------------------------------------------------------------------
def _tpu_vmem_capacity_bytes():
    try:
        return int(pltpu.get_tpu_info().vmem_capacity_bytes)
    except Exception:
        return 64 * 1024 * 1024  # conservative fallback = v7x per-core VMEM


def _vmem_limit_bytes():
    cap = _tpu_vmem_capacity_bytes()
    if cap >= 128 * 1024 * 1024:
        return 96 * 1024 * 1024      # v5e / v6e: 128 MiB physical, generous scoped limit
    return cap // 2                  # v7x: 64 MiB physical -> 32 MiB scoped


def _granule_for(dtype):
    """Token-tile row granule matching sublane packing of the streamed dtype."""
    isz = jnp.dtype(dtype).itemsize
    if isz >= 4:
        return 8
    if isz == 2:
        return 16
    return 32


def _choose_token_tile(n_tokens, d, in_bytes, out_bytes, granule):
    """Largest token tile whose double-buffered streams AND in-kernel f32 working copies
    fit comfortably in the scoped VMEM limit.  Step count is kept even when > 1 step."""
    budget = (_vmem_limit_bytes() * 3) // 4
    # 2x for BlockSpec double buffers, + ~3 f32 tile-sized temporaries used by the kernel
    # body (x.astype(f32), quantized codes, dequantized result), + the (tm, 2) param block.
    per_token = 2 * d * (in_bytes + out_bytes) + 3 * d * 4 + 16
    tm = budget // max(per_token, 1)
    tm = max(granule, min(1024, (tm // granule) * granule))
    # Never larger than the (granule-rounded) token count.
    tm = min(tm, max(granule, -(-n_tokens // granule) * granule))
    # Even number of grid steps when > 1 (balances v7x's 2 TensorCores); single-step
    # inputs keep one max-size tile (no forced split on single-TC v5e/v6e).
    steps = -(-n_tokens // tm)
    if steps > 1 and steps % 2 == 1:
        cand = tm - granule
        while cand >= granule:
            if (-(-n_tokens // cand)) % 2 == 0:
                tm = cand
                break
            cand -= granule
    return tm


def _compiler_params():
    return pltpu.CompilerParams(
        dimension_semantics=("parallel",),
        vmem_limit_bytes=_vmem_limit_bytes(),
    )


def _exact_div_for(dtype):
    # f32 keeps the reference's exact per-element divide (fully hidden behind HBM);
    # narrower streams use the per-row reciprocal to stay DMA-bound on v7x.
    return jnp.dtype(dtype) == jnp.float32


# ----------------------------------------------------------------------------
# pallas_call wrappers
# ----------------------------------------------------------------------------
def fused_find_params_qdq(x, *, maxq, clip_ratio, sym):
    """One pass over x: returns (y with x.shape/x.dtype, packed params (N, 2) f32)."""
    init_shape = x.shape
    d = init_shape[-1]
    xr = x.reshape(-1, d)
    n = xr.shape[0]
    granule = _granule_for(xr.dtype)
    tm = _choose_token_tile(n, d, xr.dtype.itemsize, xr.dtype.itemsize, granule)

    kernel = functools.partial(
        _fused_find_qdq_kernel, maxq=float(maxq), clip_ratio=float(clip_ratio),
        sym=bool(sym), exact_div=_exact_div_for(xr.dtype))
    y, params = pl.pallas_call(
        kernel,
        out_shape=(
            jax.ShapeDtypeStruct((n, d), x.dtype),
            jax.ShapeDtypeStruct((n, 2), jnp.float32),
        ),
        grid_spec=pltpu.PrefetchScalarGridSpec(
            num_scalar_prefetch=0,
            grid=(pl.cdiv(n, tm),),
            in_specs=[pl.BlockSpec((tm, d), lambda i: (i, 0))],
            out_specs=[
                pl.BlockSpec((tm, d), lambda i: (i, 0)),
                pl.BlockSpec((tm, 2), lambda i: (i, 0)),
            ],
        ),
        compiler_params=_compiler_params(),
    )(xr)
    return y.reshape(init_shape), params


def find_params_per_token(x, *, maxq, clip_ratio, sym):
    """Per-token params only.  Returns packed (N, 2) f32 params ([:,0]=scale, [:,1]=zero)."""
    d = x.shape[-1]
    xr = x.reshape(-1, d)
    n = xr.shape[0]
    granule = _granule_for(xr.dtype)
    tm = _choose_token_tile(n, d, xr.dtype.itemsize, 0, granule)

    kernel = functools.partial(
        _find_params_kernel, maxq=float(maxq), clip_ratio=float(clip_ratio), sym=bool(sym))
    params = pl.pallas_call(
        kernel,
        out_shape=jax.ShapeDtypeStruct((n, 2), jnp.float32),
        grid_spec=pltpu.PrefetchScalarGridSpec(
            num_scalar_prefetch=0,
            grid=(pl.cdiv(n, tm),),
            in_specs=[pl.BlockSpec((tm, d), lambda i: (i, 0))],
            out_specs=pl.BlockSpec((tm, 2), lambda i: (i, 0)),
        ),
        compiler_params=_compiler_params(),
    )(xr)
    return params


def quant_dequant(x, params, *, maxq, sym):
    """Quant-dequant of x with packed per-token params (N, 2) f32."""
    init_shape = x.shape
    d = init_shape[-1]
    xr = x.reshape(-1, d)
    n = xr.shape[0]
    pr = jnp.asarray(params, jnp.float32).reshape(n, 2)
    granule = _granule_for(xr.dtype)
    tm = _choose_token_tile(n, d, xr.dtype.itemsize, xr.dtype.itemsize, granule)

    kernel = functools.partial(
        _qdq_kernel, maxq=float(maxq), sym=bool(sym), exact_div=_exact_div_for(xr.dtype))
    out = pl.pallas_call(
        kernel,
        out_shape=jax.ShapeDtypeStruct((n, d), x.dtype),
        grid_spec=pltpu.PrefetchScalarGridSpec(
            num_scalar_prefetch=0,
            grid=(pl.cdiv(n, tm),),
            in_specs=[
                pl.BlockSpec((tm, d), lambda i: (i, 0)),
                pl.BlockSpec((tm, 2), lambda i: (i, 0)),
            ],
            out_specs=pl.BlockSpec((tm, d), lambda i: (i, 0)),
        ),
        compiler_params=_compiler_params(),
    )(xr, pr)
    return out.reshape(init_shape)


def quantize_act(x, *, bits, sym=False, clip_ratio=1.0):
    """jit-friendly single-pass per-token activation quant-dequant (fused kernel).

    Returns (y, scale, zero): y has x.shape/x.dtype, scale/zero have shape (N, 1) f32
    where N = prod of all dims but the last.
    """
    if bits == 16:
        n = 1
        for s in x.shape[:-1]:
            n *= s
        return x, jnp.ones((n, 1), jnp.float32), jnp.zeros((n, 1), jnp.float32)
    maxq = (2 ** (bits - 1) - 1) if sym else (2 ** bits - 1)
    y, params = fused_find_params_qdq(x, maxq=maxq, clip_ratio=clip_ratio, sym=sym)
    return y, params[:, 0:1], params[:, 1:2]


# ----------------------------------------------------------------------------
# Module-equivalent container
# ----------------------------------------------------------------------------
class ActQuantizer:
    """JAX/Pallas port of the PyTorch ActQuantizer (per-token activation quantization).

    scale/zero are stored compactly per token with shape (num_tokens, 1) f32 — broadcast-
    equivalent to the PyTorch buffers (which repeat them to the full activation shape)
    but never streamed at full activation size through HBM.

    Usage styles:
      * PyTorch-exact (two kernel passes):  q.find_params(x); y = q(x)
      * Fused single pass (recommended, jit-safe): y = q.fused_forward(x)
        or the pure function quantize_act(x, bits=..., sym=..., clip_ratio=...).
    """

    def __init__(self):
        self.maxq = 0                        # Python int: static, no device sync
        self.scale = jnp.zeros((1, 1), jnp.float32)
        self.zero = jnp.zeros((1, 1), jnp.float32)
        self._params = None                  # packed (N, 2) f32 fed to the qdq kernel
        self.bits = 16
        self.sym = False
        self.groupsize = -1
        self.clip_ratio = 1.0
        self.act_quant = "per-token"

    def free(self):
        self.scale = None
        self.zero = None
        self._params = None

    def configure(self, bits, groupsize=-1, sym=False, clip_ratio=1.0,
                  act_quant="per-tensor"):
        self.maxq = (2 ** (bits - 1) - 1) if sym else (2 ** bits - 1)
        self.bits = bits
        self.groupsize = groupsize
        self.sym = sym
        self.clip_ratio = clip_ratio
        self.act_quant = act_quant
        assert 0 < clip_ratio <= 1.0, "Clip ratio should be in (0, 1]"

    def find_params_per_token_groupwise(self, x):
        # TODO(synk): per-token group-wise (groupsize > 0) path not implemented in Pallas.
        raise NotImplementedError("groupsize > 0 not supported in the Pallas port")

    def find_params_per_tensor(self, x):
        # TODO(synk): per-tensor symmetric path not implemented in Pallas.
        raise NotImplementedError("per-tensor quantization not supported in the Pallas port")

    def _set_params(self, params):
        self._params = params
        self.scale = params[:, 0:1]
        self.zero = params[:, 1:2]

    def find_params(self, x):
        """Eager (PyTorch-exact): scale/zero populated immediately; one pass over x."""
        if self.bits == 16:
            return
        if self.groupsize > 0:
            self.find_params_per_token_groupwise(x)
            return
        params = find_params_per_token(
            x, maxq=self.maxq, clip_ratio=self.clip_ratio, sym=self.sym)
        self._set_params(params)

    def fused_forward(self, x):
        """One-pass find_params + quant-dequant on x (jit-safe; updates scale/zero)."""
        if self.bits == 16:
            return x
        y, params = fused_find_params_qdq(
            x, maxq=self.maxq, clip_ratio=self.clip_ratio, sym=self.sym)
        self._set_params(params)
        return y

    def __call__(self, x):
        x_dtype = x.dtype
        if self.bits == 16:
            return x
        if self._params is None:
            raise RuntimeError("find_params must be called before forward when bits < 16")
        return quant_dequant(
            x, self._params, maxq=self.maxq, sym=self.sym
        ).astype(x_dtype)

    # forward alias (PyTorch-style)
    forward = __call__

    def quantize(self, x):
        """Integer quantization (no dequant); small helper, pure jnp."""
        init_shape = x.shape
        xr = x.reshape(-1, init_shape[-1]).astype(jnp.float32)
        maxq = float(self.maxq)
        if self.sym:
            q = jnp.clip(jnp.round(xr / self.scale), -(maxq + 1.0), maxq)
            return q.reshape(init_shape), self.scale
        q = jnp.clip(jnp.round(xr / self.scale) + self.zero, 0.0, maxq)
        return q.reshape(init_shape), self.scale, self.zero


# ----------------------------------------------------------------------------
# Pure-jnp reference (mirrors the PyTorch math) for verification
# ----------------------------------------------------------------------------
def _ref_params(x, bits, clip_ratio, sym):
    xr = x.reshape(-1, x.shape[-1]).astype(jnp.float32)
    zeros = jnp.zeros((xr.shape[0],), jnp.float32)
    xmin = jnp.minimum(xr.min(axis=1), zeros) * clip_ratio
    xmax = jnp.maximum(xr.max(axis=1), zeros) * clip_ratio
    if sym:
        maxq = float(2 ** (bits - 1) - 1)
        xmax = jnp.maximum(jnp.abs(xmin), xmax)
        scale = jnp.where(xmax == 0.0, 1.0, xmax / maxq)
        zero = jnp.zeros_like(scale)
    else:
        maxq = float(2 ** bits - 1)
        deg = (xmin == 0.0) & (xmax == 0.0)
        xmin = jnp.where(deg, -1.0, xmin)
        xmax = jnp.where(deg, 1.0, xmax)
        scale = (xmax - xmin) / maxq
        zero = jnp.round(-xmin / scale)
    return scale[:, None], zero[:, None], maxq


def _ref_qdq(x, scale, zero, maxq, sym):
    init_shape = x.shape
    xr = x.reshape(-1, x.shape[-1]).astype(jnp.float32)
    if sym:
        q = jnp.clip(jnp.round(xr / scale), -(maxq + 1.0), maxq)
        y = scale * q
    else:
        q = jnp.clip(jnp.round(xr / scale) + zero, 0.0, maxq)
        y = scale * (q - zero)
    return y.reshape(init_shape).astype(x.dtype)


if __name__ == "__main__":
    key = jax.random.PRNGKey(0)
    batch, seq, hidden = 2, 8, 32
    x = jax.random.normal(key, (batch, seq, hidden), dtype=jnp.float32)

    quantizer = ActQuantizer()

    # Default bits=16 path: identity.
    y16 = quantizer(x)
    jax.block_until_ready(y16)
    assert jnp.array_equal(y16, x)

    # 8-bit asymmetric per-token, PyTorch-exact path: eager find_params, then forward.
    quantizer.configure(bits=8, groupsize=-1, sym=False, clip_ratio=1.0,
                        act_quant="per-token")
    quantizer.find_params(x)
    s_ref, z_ref, maxq = _ref_params(x, 8, 1.0, False)
    assert jnp.allclose(quantizer.scale, s_ref, atol=1e-6, rtol=1e-5), "scale mismatch"
    assert jnp.allclose(quantizer.zero, z_ref, atol=1e-6, rtol=1e-5), "zero mismatch"
    y = quantizer(x)
    jax.block_until_ready(y)
    y_ref = _ref_qdq(x, s_ref, z_ref, maxq, False)
    assert y.shape == x.shape and y.dtype == x.dtype
    assert jnp.allclose(y, y_ref, atol=1e-5, rtol=1e-5), "asym (two-pass path) mismatch"

    # Fused single-pass entry point (recommended deployment path).
    yf = quantizer.fused_forward(x)
    jax.block_until_ready(yf)
    assert jnp.allclose(yf, y_ref, atol=1e-5, rtol=1e-5), "fused asym mismatch"
    assert jnp.allclose(quantizer.scale, s_ref, atol=1e-6, rtol=1e-5), "fused scale mismatch"

    # Functional fused entry under jit (jit-robust fusion, no identity checks).
    jit_qa = jax.jit(functools.partial(quantize_act, bits=8, sym=False, clip_ratio=1.0))
    yj, sj, zj = jit_qa(x)
    jax.block_until_ready(yj)
    assert jnp.allclose(yj, y_ref, atol=1e-5, rtol=1e-5), "jit fused mismatch"
    assert jnp.allclose(sj, s_ref, atol=1e-6, rtol=1e-5), "jit scale mismatch"

    # Split path: params computed from x, applied to a different tensor x2.
    x2 = x * 0.5 + 0.1
    quantizer.find_params(x)
    y2 = quantizer(x2)
    jax.block_until_ready(y2)
    y2_ref = _ref_qdq(x2, s_ref, z_ref, maxq, False)
    assert jnp.allclose(y2, y2_ref, atol=1e-5, rtol=1e-5), "split-path asym mismatch"

    # 4-bit symmetric per-token (fused).
    qsym = ActQuantizer()
    qsym.configure(bits=4, groupsize=-1, sym=True, clip_ratio=1.0, act_quant="per-token")
    ys = qsym.fused_forward(x)
    jax.block_until_ready(ys)
    ss, zs, mqs = _ref_params(x, 4, 1.0, True)
    ys_ref = _ref_qdq(x, ss, zs, mqs, True)
    assert jnp.allclose(ys, ys_ref, atol=1e-5, rtol=1e-5), "sym mismatch"

    # bf16 activations stream as bf16 (per-row reciprocal path; params stay f32).
    xb = x.astype(jnp.bfloat16)
    qb = ActQuantizer()
    qb.configure(bits=8, groupsize=-1, sym=False, clip_ratio=1.0, act_quant="per-token")
    yb = qb.fused_forward(xb)
    jax.block_until_ready(yb)
    sb, zb, mqb = _ref_params(xb, 8, 1.0, False)
    yb_ref = _ref_qdq(xb, sb, zb, mqb, False)
    assert yb.dtype == jnp.bfloat16
    assert jnp.allclose(yb.astype(jnp.float32), yb_ref.astype(jnp.float32),
                        atol=5e-2, rtol=5e-2), "bf16 mismatch"

    print("KERNEL_OK")
</pallas_src>

<mosaic_0001>
module attributes {stable_mosaic.version = 11 : i64} {
  func.func @_find_params_kernel(%arg0: i32, %arg1: memref<16x32xf32, #tpu.memory_space<vmem>>, %arg2: memref<16x2xf32, #tpu.memory_space<vmem>>) attributes {dimension_semantics = [#tpu.dimension_semantics<parallel>], iteration_bounds = array<i64: 1>, scalar_prefetch = 0 : i64, scratch_operands = 0 : i64, tpu.core_type = #tpu.core_type<tc>, window_params = [{transform_indices = @transform_0, window_bounds = array<i64: 16, 32>}, {transform_indices = @transform_1, window_bounds = array<i64: 16, 2>}]} {
    %c0 = arith.constant 0 : index
    %c0_0 = arith.constant 0 : index
    %0 = vector.load %arg1[%c0, %c0_0] : memref<16x32xf32, #tpu.memory_space<vmem>>, vector<16x32xf32>
    %cst = arith.constant 0.000000e+00 : f32
    %1 = vector.broadcast %cst : f32 to vector<16x1xf32>
    %cst_1 = arith.constant dense<0x7F800000> : vector<16xf32>
    %2 = vector.multi_reduction <minimumf>, %0, %cst_1 [1] : vector<16x32xf32> to vector<16xf32>
    %3 = vector.shape_cast %2 : vector<16xf32> to vector<16x1xf32>
    %4 = arith.minimumf %3, %1 : vector<16x1xf32>
    %cst_2 = arith.constant 1.000000e+00 : f32
    %5 = vector.broadcast %cst_2 : f32 to vector<16x1xf32>
    %6 = arith.mulf %4, %5 : vector<16x1xf32>
    %cst_3 = arith.constant dense<0xFF800000> : vector<16xf32>
    %7 = vector.multi_reduction <maximumf>, %0, %cst_3 [1] : vector<16x32xf32> to vector<16xf32>
    %8 = vector.shape_cast %7 : vector<16xf32> to vector<16x1xf32>
    %9 = arith.maximumf %8, %1 : vector<16x1xf32>
    %cst_4 = arith.constant 1.000000e+00 : f32
    %10 = vector.broadcast %cst_4 : f32 to vector<16x1xf32>
    %11 = arith.mulf %9, %10 : vector<16x1xf32>
    %cst_5 = arith.constant 0.000000e+00 : f32
    %12 = vector.broadcast %cst_5 : f32 to vector<16x1xf32>
    %13 = arith.cmpf oeq, %6, %12 : vector<16x1xf32>
    %cst_6 = arith.constant 0.000000e+00 : f32
    %14 = vector.broadcast %cst_6 : f32 to vector<16x1xf32>
    %15 = arith.cmpf oeq, %11, %14 : vector<16x1xf32>
    %16 = arith.andi %13, %15 : vector<16x1xi1>
    %cst_7 = arith.constant -1.000000e+00 : f32
    %17 = vector.broadcast %cst_7 : f32 to vector<16x1xf32>
    %18 = arith.select %16, %17, %6 : vector<16x1xi1>, vector<16x1xf32>
    %cst_8 = arith.constant 1.000000e+00 : f32
    %19 = vector.broadcast %cst_8 : f32 to vector<16x1xf32>
    %20 = arith.select %16, %19, %11 : vector<16x1xi1>, vector<16x1xf32>
    %21 = arith.subf %20, %18 : vector<16x1xf32>
    %cst_9 = arith.constant 2.550000e+02 : f32
    %22 = vector.broadcast %cst_9 : f32 to vector<16x1xf32>
    %23 = arith.divf %21, %22 : vector<16x1xf32>
    %cst_10 = arith.constant 0.000000e+00 : f32
    %24 = vector.broadcast %cst_10 : f32 to vector<16x1xf32>
    %25 = arith.subf %24, %18 : vector<16x1xf32>
    %26 = arith.divf %25, %23 : vector<16x1xf32>
    %27 = math.roundeven %26 : vector<16x1xf32>
    %c0_11 = arith.constant 0 : index
    %c0_12 = arith.constant 0 : index
    %28 = vector.load %arg2[%c0_11, %c0_12] : memref<16x2xf32, #tpu.memory_space<vmem>>, vector<16x1xf32>
    tpu.vector_store %arg2[%c0_11, %c0_12], %23 {strides = array<i32>} : memref<16x2xf32, #tpu.memory_space<vmem>>, vector<16x1xf32>,
    %c0_13 = arith.constant 0 : index
    %c1 = arith.constant 1 : index
    %29 = vector.load %arg2[%c0_13, %c1] : memref<16x2xf32, #tpu.memory_space<vmem>>, vector<16x1xf32>
    tpu.vector_store %arg2[%c0_13, %c1], %27 {strides = array<i32>} : memref<16x2xf32, #tpu.memory_space<vmem>>, vector<16x1xf32>,
    return
  }
  func.func @transform_0(%arg0: i32) -> (i32, i32) {
    %c0_i32 = arith.constant 0 : i32
    %c0_i32_0 = arith.constant 0 : i32
    return %arg0, %c0_i32 : i32, i32
  }
  func.func @transform_1(%arg0: i32) -> (i32, i32) {
    %c0_i32 = arith.constant 0 : i32
    %c0_i32_0 = arith.constant 0 : i32
    return %arg0, %c0_i32 : i32, i32
  }
}

</mosaic_0001>

<llo_original>
// kernel: tpu_custom_call.1
$region0: #{tpu_custom_call.1}
  #allocation0 [shape = 'u32[]', space=smem, size = 0x4, offset = 0x4, fixed_abs, tag = 'smem constant byte address 0x4 - core index']
  #allocation1 [shape = 'u32[144,128]{1,0:T(1,128)}', space=vmem, size = 0x12000, scoped, tag = 'internal scratch']
  %s0 = inlined_call_operand.hbm [shape: f32[16,32], index: 0, kind: input, shape index: {}]
  %s1 = inlined_call_operand.vmem [shape: f32[16,2], index: 1, kind: output, shape index: {}]
  %s2 = sld [smem:[#allocation0]]
  $region18: #{tpu_custom_call.1} parent=0
    _
  %s4 = ssub.s32 1, %s2
  %s5 = scalar_select 0, %s4, %s2
  $region1: #{tpu_custom_call.1} parent=0
    #allocation2 [shape = 'u8[8192]{0}', space=vmem, size = 0x2000, scoped, tag = 'input window, operand 0, single buffered']
    #allocation3 [shape = 's32[1]{0}', space=sflag, size = 0x4, scoped, tag = 'scoped memory for tpu_custom_call.1']
    %6 = vsyncpa [#allocation3], 0
    // Predicated region
    $region2: #{tpu_custom_call.1} parent=1 // pred_check
      _
    $region3: #{tpu_custom_call.1} parent=1 // pred_check_branch
      %8 = sbr.rel (0) target = $region5
    $region4: #{tpu_custom_call.1} parent=1 // pred_region
      %s10 = ssub.s32 256, 256
      %11 = vsyncadd [#allocation3], %s10
      %s12 = sshll.u32 [#allocation2], 4
      %s13 = int_to_ptr.vmem [resolvable:$true] %s12
      %18 = dma.hbm_to_vmem [thread:$0]  %s0, 256, %s13, [#allocation3], 128, 128, 8
    $region5: #{tpu_custom_call.1} parent=1 // pred_fallthru
      _
    // Predicated region
    $region6: #{tpu_custom_call.1} parent=1 // pred_check
      _
    $region7: #{tpu_custom_call.1} parent=1 // pred_check_branch
      %20 = sbr.rel (0) target = $region9
    $region8: #{tpu_custom_call.1} parent=1 // pred_region
      %21 = dma.done [#allocation3], 256
    $region9: #{tpu_custom_call.1} parent=1 // pred_fallthru
      _
    %v22 = vld [vmem:[#allocation2] sm:$0xff]
    %v23 = vld [vmem:[#allocation2 + $0x8] sm:$0xff]
    %vm24 = vcmask 261120
    %v25 = vsel %vm24, %v22, inf
    %26 = vmin.xlane.f32.xlu0 %v25
    %v27 = vpop.xlane.xlu0 %26
    %v28 = vsel %vm24, %v23, inf
    %29 = vmin.xlane.f32.xlu0 %v28
    %v30 = vpop.xlane.xlu0 %29
    %v31 = vmin.f32 %v27, 0.0
    %v32 = vmin.f32 %v30, 0.0
    %v33 = vsel %vm24, %v22, -inf
    %34 = vmax.xlane.f32.xlu0 %v33
    %v35 = vpop.xlane.xlu0 %34
    %v36 = vsel %vm24, %v23, -inf
    %37 = vmax.xlane.f32.xlu0 %v36
    %v38 = vpop.xlane.xlu0 %37
    %v39 = vmax.f32 %v35, 0.0
    %v40 = vmax.f32 %v38, 0.0
    %vm41 = vcmp.eq.f32.partialorder %v31, 0.0
    %vm42 = vcmp.eq.f32.partialorder %v32, 0.0
    %vm43 = vcmp.eq.f32.partialorder %v39, 0.0
    %vm44 = vcmp.eq.f32.partialorder %v40, 0.0
    %vm45 = vmand %vm41, %vm43
    %vm46 = vmand %vm42, %vm44
    %v47 = vsel %vm45, -1.0, %v31
    %v48 = vsel %vm46, -1.0, %v32
    %v49 = vsel %vm45, 1.0, %v39
    %v50 = vsel %vm46, 1.0, %v40
    %v51 = vsub.f32 %v49, %v47
    %v52 = vsub.f32 %v50, %v48
    %v53 = vrcp.pop 255.0
    %v54 = vmul.f32 %v51, %v53
    %v55 = vmul.f32 %v52, %v53
    %v56 = vsub.f32 0.0, %v47
    %v57 = vsub.f32 0.0, %v48
    %v58 = vrcp.pop %v54
    %v59 = vmul.f32 %v56, %v58
    %v60 = vrcp.pop %v55
    %v61 = vmul.f32 %v57, %v60
    %v62 = vround.ne.pseudo %v59
    %v63 = vround.ne.pseudo %v61
    %vm64 = vcmask 7168
    %65 = vst.msk [vmem:[%s1] sm:$0xff] %vm64, %v54
    %66 = vst.msk [vmem:[%s1 + $0x8] sm:$0xff] %vm64, %v55
    %vm67 = vcmask 15368
    %68 = vst.msk [vmem:[%s1] sm:$0xff] %vm67, %v62
    %69 = vst.msk [vmem:[%s1 + $0x8] sm:$0xff] %vm67, %v63
    // Predicated region
    $region10: #{tpu_custom_call.1} parent=1 // pred_check
      _
    $region11: #{tpu_custom_call.1} parent=1 // pred_check_branch
      %71 = sbr.rel (0) target = $region13
    $region12: #{tpu_custom_call.1} parent=1 // pred_region
      _
    $region13: #{tpu_custom_call.1} parent=1 // pred_fallthru
      _
    // Predicated region
    $region14: #{tpu_custom_call.1} parent=1 // pred_check
      _
    $region15: #{tpu_custom_call.1} parent=1 // pred_check_branch
      %73 = sbr.rel (0) target = $region17
    $region16: #{tpu_custom_call.1} parent=1 // pred_region
      _
    $region17: #{tpu_custom_call.1} parent=1 // pred_fallthru
      _
    %74 = vsyncpa [#allocation3], 1

</llo_original>
